<compile_context>
chip_gen: v7x
topology: tpu7x:2x2x1
jax: 0.10.0
libtpu: 0.0.40
codegen_flags: <defaults>
</compile_context>

<pallas_src>
import functools
import math

import jax
import jax.numpy as jnp
from jax import lax
from jax.experimental import pallas as pl
from jax.experimental.pallas import tpu as pltpu


def _round_up(a, b):
    return ((a + b - 1) // b) * b


# ---------------------------------------------------------------------------
# dim == 2 (time stripes): sparse, in-place stripe zeroing via manual DMA.
# ---------------------------------------------------------------------------
def _drop_time_stripes_kernel(bgn_ref, wid_ref, x_hbm, o_hbm, buf, load_sem,
                              store_sem, *, stripes_num, window, cb,
                              time_steps):
    """Zero rows [bgn, bgn+width) of o_hbm[b, c0:c0+cb] for each stripe.

    bgn_ref / wid_ref : flat (B * stripes_num,) int32 in SMEM.
    x_hbm / o_hbm     : (B, C, T, F) HBM refs; aliased (same buffer).
    buf               : (stripes_num, cb, window, F) VMEM scratch.
    """
    del x_hbm  # aliased with o_hbm; all work happens in place through o_hbm
    b = pl.program_id(0)
    c0 = pl.program_id(1) * cb

    # Read every stripe's scalars up front: DMA waits break SMEM sst->sld
    # forwarding, so keep all scalar/address math off the wait shadow.
    bgns, wids, starts, actives = [], [], [], []
    for s in range(stripes_num):
        bgn = bgn_ref[b * stripes_num + s]
        wid = wid_ref[b * stripes_num + s]
        bgns.append(bgn)
        wids.append(wid)
        # Window of `window` rows that contains the whole stripe and stays
        # inside [0, T).  (width <= drop_width - 1 <= window - 1.)
        starts.append(jnp.minimum(bgn, time_steps - window))
        actives.append(wid > 0)

    views, loads, stores = [], [], []
    for s in range(stripes_num):
        view = o_hbm.at[b, pl.ds(c0, cb), pl.ds(starts[s], window), :]
        views.append(view)
        loads.append(pltpu.make_async_copy(view, buf.at[s], load_sem.at[s]))
        stores.append(pltpu.make_async_copy(buf.at[s], view, store_sem.at[s]))

    # Phase 1: launch every window load.  All loads read the original
    # (pre-drop) data, so overlapping stripe windows create no RAW hazard.
    for s in range(stripes_num):
        @pl.when(actives[s])
        def _(s=s):
            loads[s].start()

    # Phase 2: mask each window with the union of ALL stripes that fall in it
    # (overlapping windows therefore write byte-identical data) and store.
    for s in range(stripes_num):
        @pl.when(actives[s])
        def _(s=s):
            loads[s].wait()
            row = lax.broadcasted_iota(jnp.int32, (1, window, 1), 1) + starts[s]
            keep = jnp.ones((1, window, 1), dtype=jnp.bool_)
            for t in range(stripes_num):
                keep = jnp.logical_and(
                    keep,
                    jnp.logical_or(row < bgns[t], row >= bgns[t] + wids[t]))
            buf[s] = buf[s] * keep.astype(buf.dtype)
            stores[s].start()

    # Phase 3: drain all stores before this grid step finishes (later grid
    # steps touch disjoint HBM regions, so nothing else needs serializing).
    for s in range(stripes_num):
        @pl.when(actives[s])
        def _(s=s):
            stores[s].wait()


def _drop_time_stripes(x, bgn, wid, *, drop_width, stripes_num):
    B, C, T, F = x.shape
    itemsize = x.dtype.itemsize

    # Widen the RMW window: sublane-aligned and each per-channel contiguous
    # HBM segment >= ~512 B, so the tiny strided DMAs stay efficient.  The
    # exact-stripe mask inside the window preserves semantics.
    sublane = max(1, 32 // itemsize)                      # 8 for f32, 16 bf16
    min_rows = -(-512 // max(1, F * itemsize))            # ceil(512 / row B)
    window = max(_round_up(drop_width, sublane), _round_up(min_rows, sublane))
    window = min(window, T)
    window = max(window, drop_width)

    # Channel blocking: bound scratch VMEM and, for batch==1, give the second
    # TensorCore (v7x megacore) something to do.
    budget = 2 * 1024 * 1024
    cb = 1
    for d in range(1, C + 1):
        if C % d == 0 and stripes_num * d * window * F * itemsize <= budget:
            cb = d
    if B < 2 and cb == C and C % 2 == 0:
        cb = C // 2
    n_cblk = C // cb

    kernel = functools.partial(
        _drop_time_stripes_kernel, stripes_num=stripes_num, window=window,
        cb=cb, time_steps=T)
    touched = 2 * B * stripes_num * C * window * F * itemsize
    return pl.pallas_call(
        kernel,
        grid=(B, n_cblk),
        in_specs=[
            pl.BlockSpec(memory_space=pltpu.MemorySpace.SMEM),   # bgn (flat)
            pl.BlockSpec(memory_space=pltpu.MemorySpace.SMEM),   # wid (flat)
            pl.BlockSpec(memory_space=pl.ANY),                   # x in HBM
        ],
        out_specs=pl.BlockSpec(memory_space=pl.ANY),
        out_shape=jax.ShapeDtypeStruct(x.shape, x.dtype),
        scratch_shapes=[
            pltpu.VMEM((stripes_num, cb, window, F), x.dtype),
            pltpu.SemaphoreType.DMA((stripes_num,)),              # load sems
            pltpu.SemaphoreType.DMA((stripes_num,)),              # store sems
        ],
        # x (input 2) shares its buffer with the output: untouched rows are
        # preserved for free, matching the module's in-place semantics.
        # Callers should donate x at the jit boundary (donate_argnums) so XLA
        # does not insert a defensive full-tensor copy.
        input_output_aliases={2: 0},
        compiler_params=pltpu.CompilerParams(
            dimension_semantics=("parallel", "parallel")),
        cost_estimate=pl.CostEstimate(
            flops=0, transcendentals=0, bytes_accessed=touched),
    )(bgn, wid, x)


# ---------------------------------------------------------------------------
# dim == 3 (freq stripes): lane-flattened, tiled mask-multiply full pass.
# ---------------------------------------------------------------------------
def _drop_freq_stripes_kernel(bgn_ref, wid_ref, x_ref, o_ref, *, stripes_num,
                              freq_bins):
    b = pl.program_id(0)
    lanes = o_ref.shape[-1]
    pos = lax.broadcasted_iota(jnp.int32, (1, 1, lanes), 2)
    # Block width is a multiple of freq_bins, so local index mod F == global F.
    if freq_bins & (freq_bins - 1) == 0:
        f = pos & (freq_bins - 1)
    else:
        f = pos % freq_bins
    keep = jnp.ones((1, 1, lanes), dtype=jnp.bool_)
    for s in range(stripes_num):  # static unroll; stripes_num is small
        bgn = bgn_ref[b * stripes_num + s]
        wid = wid_ref[b * stripes_num + s]
        keep = jnp.logical_and(keep, jnp.logical_or(f < bgn, f >= bgn + wid))
    o_ref[...] = x_ref[...] * keep.astype(o_ref.dtype)


def _drop_freq_stripes(x, bgn, wid, *, stripes_num):
    B, C, T, F = x.shape
    itemsize = x.dtype.itemsize
    TF = T * F
    # Flatten (T, F) into one lane axis so stores stay lane-dense even when
    # F < 128 (row-major collapse: free reshape outside the kernel).
    x2 = x.reshape(B, C, TF)

    # Lane block: multiple of both F (mask correctness) and 128 (lane-dense
    # unmasked stores); target ~4 MiB per block, explicit 32 MiB VMEM limit
    # (in+out double buffered = 4x block) — safe on v5e/v6e/v7x.
    lane_unit = (F * 128) // math.gcd(F, 128)
    target_block_bytes = 4 * 1024 * 1024
    target_lanes = max(lane_unit, target_block_bytes // max(1, C * itemsize))
    lb = max(lane_unit, (target_lanes // lane_unit) * lane_unit)
    if lb >= TF:
        lb = TF
    n_blocks = pl.cdiv(TF, lb)

    kernel = functools.partial(_drop_freq_stripes_kernel,
                               stripes_num=stripes_num, freq_bins=F)
    out = pl.pallas_call(
        kernel,
        grid=(B, n_blocks),
        in_specs=[
            pl.BlockSpec(memory_space=pltpu.MemorySpace.SMEM),   # bgn (flat)
            pl.BlockSpec(memory_space=pltpu.MemorySpace.SMEM),   # wid (flat)
            pl.BlockSpec((1, C, lb), lambda b, j: (b, 0, j)),
        ],
        out_specs=pl.BlockSpec((1, C, lb), lambda b, j: (b, 0, j)),
        out_shape=jax.ShapeDtypeStruct((B, C, TF), x.dtype),
        compiler_params=pltpu.CompilerParams(
            dimension_semantics=("parallel", "parallel"),
            vmem_limit_bytes=32 * 1024 * 1024),
        cost_estimate=pl.CostEstimate(
            flops=0, transcendentals=0, bytes_accessed=2 * x.size * itemsize),
    )(bgn, wid, x2)
    return out.reshape(B, C, T, F)


# ---------------------------------------------------------------------------
# Public entry points.
# ---------------------------------------------------------------------------
def drop_stripes(x, bgn, wid, *, dim, drop_width, stripes_num, training=True):
    """DropStripes forward on a (B, C, T, F) tensor.

    bgn / wid: flat int32 arrays of length B * stripes_num (b-major).
    For dim == 2, callers should donate x (jax.jit donate_argnums) so the
    aliased in-place stripe update avoids XLA's defensive full-tensor copy.
    """
    assert x.ndim == 4
    assert dim in (2, 3)
    assert 1 <= drop_width <= x.shape[dim]
    if not training:
        return x
    if dim == 2:
        return _drop_time_stripes(x, bgn, wid, drop_width=drop_width,
                                  stripes_num=stripes_num)
    return _drop_freq_stripes(x, bgn, wid, stripes_num=stripes_num)


# TODO(synk): torch.randint's RNG stream is not bit-reproduced; the sampling
# below only matches its distribution (width ~ U[0,drop_width),
# bgn ~ U[0, total_width - width)).
def sample_stripe_params(key, batch_size, total_width, drop_width, stripes_num):
    k1, k2 = jax.random.split(key)
    n = batch_size * stripes_num
    widths = jax.random.randint(k1, (n,), 0, drop_width, dtype=jnp.int32)
    maxval = jnp.maximum(total_width - widths, 1)   # guard degenerate range
    bgns = jax.random.randint(k2, (n,), 0, maxval, dtype=jnp.int32)
    return bgns, widths


def _reference(x, bgns, widths, dim, stripes_num):
    """Pure-JAX reference with the same masking semantics."""
    B = x.shape[0]
    n = x.shape[dim]
    idx = jnp.arange(n)
    b2 = bgns.reshape(B, stripes_num)
    w2 = widths.reshape(B, stripes_num)
    mask = jnp.ones((B, n), dtype=bool)
    for s in range(stripes_num):
        b0 = b2[:, s][:, None]
        w0 = w2[:, s][:, None]
        mask = mask & ~((idx[None, :] >= b0) & (idx[None, :] < b0 + w0))
    if dim == 2:
        return x * mask[:, None, :, None].astype(x.dtype)
    return x * mask[:, None, None, :].astype(x.dtype)


if __name__ == "__main__":
    # Module config (DropStripes has no learnable parameters).
    drop_width = 4
    stripes_num = 2
    training = True   # eval mode just returns the input unchanged

    key = jax.random.PRNGKey(0)
    kx, kp_time, kp_freq = jax.random.split(key, 3)

    B, C, T, F = 2, 4, 16, 16
    x = jax.random.normal(kx, (B, C, T, F), dtype=jnp.float32)

    all_ok = True

    # ---- dim == 3 (freq stripes): tiled full pass ----
    bgn_f, wid_f = sample_stripe_params(kp_freq, B, F, drop_width, stripes_num)
    out_f = drop_stripes(x, bgn_f, wid_f, dim=3, drop_width=drop_width,
                         stripes_num=stripes_num, training=training)
    out_f = jax.block_until_ready(out_f)
    ref_f = _reference(x, bgn_f, wid_f, 3, stripes_num)
    all_ok &= bool(jnp.allclose(out_f, ref_f))

    # ---- dim == 2 (time stripes): sparse in-place path, donate the input ----
    bgn_t, wid_t = sample_stripe_params(kp_time, B, T, drop_width, stripes_num)
    ref_t = _reference(x, bgn_t, wid_t, 2, stripes_num)
    time_fn = jax.jit(
        functools.partial(drop_stripes, dim=2, drop_width=drop_width,
                          stripes_num=stripes_num, training=training),
        donate_argnums=(0,))
    x_donate = x + 0.0   # fresh buffer to donate; keep x intact
    out_t = jax.block_until_ready(time_fn(x_donate, bgn_t, wid_t))
    all_ok &= bool(jnp.allclose(out_t, ref_t))

    assert all_ok, "mismatch vs reference"
    print("KERNEL_OK")
</pallas_src>

<mosaic_0001>
module attributes {stable_mosaic.version = 11 : i64} {
  func.func @_drop_freq_stripes_kernel(%arg0: i32, %arg1: i32, %arg2: memref<4xi32, #tpu.memory_space<smem>>, %arg3: memref<4xi32, #tpu.memory_space<smem>>, %arg4: memref<1x4x256xf32, #tpu.memory_space<vmem>>, %arg5: memref<1x4x256xf32, #tpu.memory_space<vmem>>) attributes {dimension_semantics = [#tpu.dimension_semantics<parallel>, #tpu.dimension_semantics<parallel>], iteration_bounds = array<i64: 2, 1>, scalar_prefetch = 0 : i64, scratch_operands = 0 : i64, tpu.core_type = #tpu.core_type<tc>, window_params = [{transform_indices = @transform_0, window_bounds = array<i64: 4>}, {transform_indices = @transform_1, window_bounds = array<i64: 4>}, {transform_indices = @transform_2, window_bounds = array<i64: 1, 4, 256>}, {transform_indices = @transform_3, window_bounds = array<i64: 1, 4, 256>}]} {
    %0 = tpu.iota {dimensions = array<i32: 2>} : vector<1x1x256xi32>
    %c15_i32 = arith.constant 15 : i32
    %1 = vector.broadcast %c15_i32 : i32 to vector<1x1x256xi32>
    %2 = arith.andi %0, %1 : vector<1x1x256xi32>
    %true = arith.constant true
    %3 = vector.broadcast %true : i1 to vector<1x1x256xi1>
    %c2_i32 = arith.constant 2 : i32
    %4 = arith.muli %arg0, %c2_i32 : i32
    %c0_i32 = arith.constant 0 : i32
    %5 = arith.addi %4, %c0_i32 : i32
    %6 = arith.index_cast %5 : i32 to index
    %7 = memref.load %arg2[%6] : memref<4xi32, #tpu.memory_space<smem>>
    %c2_i32_0 = arith.constant 2 : i32
    %8 = arith.muli %arg0, %c2_i32_0 : i32
    %c0_i32_1 = arith.constant 0 : i32
    %9 = arith.addi %8, %c0_i32_1 : i32
    %10 = arith.index_cast %9 : i32 to index
    %11 = memref.load %arg3[%10] : memref<4xi32, #tpu.memory_space<smem>>
    %12 = vector.broadcast %7 : i32 to vector<1x1x256xi32>
    %13 = arith.cmpi slt, %2, %12 : vector<1x1x256xi32>
    %14 = arith.addi %7, %11 : i32
    %15 = vector.broadcast %14 : i32 to vector<1x1x256xi32>
    %16 = arith.cmpi sge, %2, %15 : vector<1x1x256xi32>
    %17 = arith.ori %13, %16 : vector<1x1x256xi1>
    %18 = arith.andi %3, %17 : vector<1x1x256xi1>
    %c2_i32_2 = arith.constant 2 : i32
    %19 = arith.muli %arg0, %c2_i32_2 : i32
    %c1_i32 = arith.constant 1 : i32
    %20 = arith.addi %19, %c1_i32 : i32
    %21 = arith.index_cast %20 : i32 to index
    %22 = memref.load %arg2[%21] : memref<4xi32, #tpu.memory_space<smem>>
    %c2_i32_3 = arith.constant 2 : i32
    %23 = arith.muli %arg0, %c2_i32_3 : i32
    %c1_i32_4 = arith.constant 1 : i32
    %24 = arith.addi %23, %c1_i32_4 : i32
    %25 = arith.index_cast %24 : i32 to index
    %26 = memref.load %arg3[%25] : memref<4xi32, #tpu.memory_space<smem>>
    %27 = vector.broadcast %22 : i32 to vector<1x1x256xi32>
    %28 = arith.cmpi slt, %2, %27 : vector<1x1x256xi32>
    %29 = arith.addi %22, %26 : i32
    %30 = vector.broadcast %29 : i32 to vector<1x1x256xi32>
    %31 = arith.cmpi sge, %2, %30 : vector<1x1x256xi32>
    %32 = arith.ori %28, %31 : vector<1x1x256xi1>
    %33 = arith.andi %18, %32 : vector<1x1x256xi1>
    %c0 = arith.constant 0 : index
    %c0_5 = arith.constant 0 : index
    %c0_6 = arith.constant 0 : index
    %34 = vector.load %arg4[%c0, %c0_5, %c0_6] : memref<1x4x256xf32, #tpu.memory_space<vmem>>, vector<1x4x256xf32>
    %35 = arith.extui %33 : vector<1x1x256xi1> to vector<1x1x256xi32>
    %36 = arith.sitofp %35 : vector<1x1x256xi32> to vector<1x1x256xf32>
    %37 = vector.broadcast %36 : vector<1x1x256xf32> to vector<1x4x256xf32>
    %38 = arith.mulf %34, %37 : vector<1x4x256xf32>
    %c0_7 = arith.constant 0 : index
    %c0_8 = arith.constant 0 : index
    %c0_9 = arith.constant 0 : index
    %39 = vector.load %arg5[%c0_7, %c0_8, %c0_9] : memref<1x4x256xf32, #tpu.memory_space<vmem>>, vector<1x4x256xf32>
    tpu.vector_store %arg5[%c0_7, %c0_8, %c0_9], %38 {strides = array<i32>} : memref<1x4x256xf32, #tpu.memory_space<vmem>>, vector<1x4x256xf32>,
    return
  }
  func.func @transform_0(%arg0: i32, %arg1: i32) -> i32 {
    %c0_i32 = arith.constant 0 : i32
    %c0_i32_0 = arith.constant 0 : i32
    return %c0_i32 : i32
  }
  func.func @transform_1(%arg0: i32, %arg1: i32) -> i32 {
    %c0_i32 = arith.constant 0 : i32
    %c0_i32_0 = arith.constant 0 : i32
    return %c0_i32 : i32
  }
  func.func @transform_2(%arg0: i32, %arg1: i32) -> (i32, i32, i32) {
    %c0_i32 = arith.constant 0 : i32
    %c0_i32_0 = arith.constant 0 : i32
    return %arg0, %c0_i32, %arg1 : i32, i32, i32
  }
  func.func @transform_3(%arg0: i32, %arg1: i32) -> (i32, i32, i32) {
    %c0_i32 = arith.constant 0 : i32
    %c0_i32_0 = arith.constant 0 : i32
    return %arg0, %c0_i32, %arg1 : i32, i32, i32
  }
}

</mosaic_0001>

<llo_original>
// kernel: tpu_custom_call.1
$region0: #{tpu_custom_call.1}
  #allocation0 [shape = 'u32[]', space=smem, size = 0x4, offset = 0x4, fixed_abs, tag = 'smem constant byte address 0x4 - core index']
  #allocation1 [shape = 'u32[144,128]{1,0:T(1,128)}', space=vmem, size = 0x12000, scoped, tag = 'internal scratch']
  %s0 = inlined_call_operand.hbm [shape: s32[4], index: 0, kind: input, shape index: {}]
  %s1 = inlined_call_operand.vmem [shape: s32[4], index: 1, kind: input, shape index: {}]
  %s2 = inlined_call_operand.hbm [shape: f32[2,4,256], index: 2, kind: input, shape index: {}]
  %s3 = inlined_call_operand.hbm [shape: f32[2,4,256], index: 3, kind: output, shape index: {}]
  %s4 = sld [smem:[#allocation0]]
  $region57: #{tpu_custom_call.1} parent=0
    _
  %s6 = ssub.s32 1, %s4
  %s7 = scalar_select 0, %s6, %s4
  $region1: #{tpu_custom_call.1} parent=0
    #allocation2 [shape = 'u8[512]{0}', space=smem, size = 0x200, scoped, tag = 'input window, operand 0, single buffered']
    #allocation3 [shape = 's32[2]{0}', space=sflag, size = 0x8, scoped, tag = 'scoped memory for tpu_custom_call.1']
    #allocation4 [shape = 's32[2]{0}', space=sflag, size = 0x8, scoped, tag = 'scoped memory for tpu_custom_call.1']
    #allocation5 [shape = 's32[2]{0}', space=sflag, size = 0x8, scoped, tag = 'scoped memory for tpu_custom_call.1']
    #allocation6 [shape = 's32[2]{0}', space=sflag, size = 0x8, scoped, tag = 'scoped memory for tpu_custom_call.1']
    #allocation7 [shape = 'u8[512]{0}', space=smem, size = 0x200, scoped, tag = 'input window, operand 1, single buffered']
    #allocation8 [shape = 'u8[8192]{0}', space=vmem, size = 0x2000, scoped, tag = 'input window, operand 2']
    #allocation9 [shape = 'u8[8192]{0}', space=vmem, size = 0x2000, scoped, tag = 'output window, operand 0']
    %8 = vsyncpa [#allocation5], 0
    %9 = vsyncpa [#allocation6], 0
    %10 = vsyncpa [#allocation3], 0
    %s11 = scalar_lea.sflag [#allocation3], 1
    %12 = vsyncpa %s11, 0
    %13 = vsyncpa [#allocation4], 0
    %s14 = scalar_lea.sflag [#allocation4], 1
    %15 = vsyncpa %s14, 0
    loop: start=0, step=1, limit=4
    $region2: #{tpu_custom_call.1} parent=1 // loop_pre_header
      _
    $region3: #{tpu_custom_call.1} parent=1 // loop_header
      %s17 = sphi 0, %s21
      %p18 = scmp.ge.s32.totalorder %s17, 4
      %s24 = sphi 0, %s36
      %s25 = sphi 0, %s32
      %s26 = sphi 0, %s24
      %s27 = sphi 0, %s25
      %s28 = sphi 0, %s26
      %s29 = sphi 0, %s27
      %s37 = sphi 0, %s37
      %s39 = sphi 0, %s37
      %s40 = sphi 0, %s39
      %s54 = sphi 0, %s40
      %s58 = sphi 0, %s58
      %s60 = sphi 0, %s58
      %s61 = sphi 0, %s60
      %s75 = sphi 0, %s61
      %s83 = sphi 0, %s85
      %s86 = sphi 0, %s83
      %s87 = sphi 0, %s86
      %s103 = sphi 0, %s87
      %s111 = sphi 0, %s113
      %s114 = sphi 0, %s111
      %s115 = sphi 0, %s114
      %s131 = sphi 0, %s115
    $region4: #{tpu_custom_call.1} parent=1 // loop_header_branch
      %20 = sbr.rel (%p18) target = $region8
    $region5: #{tpu_custom_call.1} parent=1 // loop_body
      %s22 = ssub.s32 %s17, 1
      %s23 = ssub.s32 %s17, 2
      %s30 = sadd.s32 1, %s25
      %p31 = scmp.ge.s32.totalorder %s30, 1
      %s32 = scalar_select %p31, 0, %s30
      %s33 = sadd.s32 1, %s24
      %s34 = scalar_select %p31, %s33, %s24
      %p35 = scmp.ge.s32.totalorder %s34, 2
      %s36 = scalar_select %p35, 0, %s34
      %s38 = sadd.s32 %s37, 1
      %p41 = scmp.eq.s32.totalorder %s17, 1
      %p42 = scmp.ne.s32.totalorder %s37, %s39
      %p43 = scmp.eq.s32.totalorder %s17, 0
      %p44 = por %p42, %p43
      %p45 = scmp.ne.s32.totalorder %s37, %s39
      %p46 = scmp.eq.s32.totalorder %s22, 1
      %p47 = por %p45, %p46
      %p48 = scmp.ne.s32.totalorder %s39, %s40
      %p49 = scmp.eq.s32.totalorder %s22, 0
      %p50 = por %p48, %p49
      %p51 = scmp.ne.s32.totalorder %s39, %s40
      %p52 = scmp.eq.s32.totalorder %s23, 1
      %p53 = por %p51, %p52
      %p55 = scmp.ne.s32.totalorder %s40, %s54
      %p56 = scmp.eq.s32.totalorder %s23, 0
      %p57 = por %p55, %p56
      %s59 = sadd.s32 %s58, 1
      %p62 = scmp.eq.s32.totalorder %s17, 1
      %p63 = scmp.ne.s32.totalorder %s58, %s60
      %p64 = scmp.eq.s32.totalorder %s17, 0
      %p65 = por %p63, %p64
      %p66 = scmp.ne.s32.totalorder %s58, %s60
      %p67 = scmp.eq.s32.totalorder %s22, 1
      %p68 = por %p66, %p67
      %p69 = scmp.ne.s32.totalorder %s60, %s61
      %p70 = scmp.eq.s32.totalorder %s22, 0
      %p71 = por %p69, %p70
      %p72 = scmp.ne.s32.totalorder %s60, %s61
      %p73 = scmp.eq.s32.totalorder %s23, 1
      %p74 = por %p72, %p73
      %p76 = scmp.ne.s32.totalorder %s61, %s75
      %p77 = scmp.eq.s32.totalorder %s23, 0
      %p78 = por %p76, %p77
      %s79 = ssub.s32 %s24, %s36
      %s80 = ssub.s32 %s25, %s32
      %s81 = sor.u32 %s79, %s80
      %p82 = scmp.eq.s32.totalorder %s81, 0
      %s84 = sadd.s32 %s83, 1
      %s85 = scalar_select %p82, %s83, %s84
      %p88 = pneg %p82
      %p89 = scmp.eq.s32.totalorder %s17, 1
      %p90 = por %p88, %p89
      %p91 = scmp.ne.s32.totalorder %s83, %s86
      %p92 = scmp.eq.s32.totalorder %s17, 0
      %p93 = por %p91, %p92
      %p94 = scmp.ne.s32.totalorder %s83, %s86
      %p95 = scmp.eq.s32.totalorder %s22, 1
      %p96 = por %p94, %p95
      %p97 = scmp.ne.s32.totalorder %s86, %s87
      %p98 = scmp.eq.s32.totalorder %s22, 0
      %p99 = por %p97, %p98
      %p100 = scmp.ne.s32.totalorder %s86, %s87
      %p101 = scmp.eq.s32.totalorder %s23, 1
      %p102 = por %p100, %p101
      %p104 = scmp.ne.s32.totalorder %s87, %s103
      %p105 = scmp.eq.s32.totalorder %s23, 0
      %p106 = por %p104, %p105
      %s107 = ssub.s32 %s24, %s36
      %s108 = ssub.s32 %s25, %s32
      %s109 = sor.u32 %s107, %s108
      %p110 = scmp.eq.s32.totalorder %s109, 0
      %s112 = sadd.s32 %s111, 1
      %s113 = scalar_select %p110, %s111, %s112
      %p116 = pneg %p110
      %p117 = scmp.eq.s32.totalorder %s17, 1
      %p118 = por %p116, %p117
      %p119 = scmp.ne.s32.totalorder %s111, %s114
      %p120 = scmp.eq.s32.totalorder %s17, 0
      %p121 = por %p119, %p120
      %p122 = scmp.ne.s32.totalorder %s111, %s114
      %p123 = scmp.eq.s32.totalorder %s22, 1
      %p124 = por %p122, %p123
      %p125 = scmp.ne.s32.totalorder %s114, %s115
      %p126 = scmp.eq.s32.totalorder %s22, 0
      %p127 = por %p125, %p126
      %p128 = scmp.ne.s32.totalorder %s114, %s115
      %p129 = scmp.eq.s32.totalorder %s23, 1
      %p130 = por %p128, %p129
      %p132 = scmp.ne.s32.totalorder %s115, %s131
      %p133 = scmp.eq.s32.totalorder %s23, 0
      %p134 = por %p132, %p133
      %p135 = scmp.le.s32.totalorder 1, %s17
      %p136 = scmp.lt.s32.totalorder %s17, 3
      %p137 = pnand %p135, %p136
      %p138 = pneg %p137
      // Predicated region
      $region9: #{tpu_custom_call.1} parent=5 // pred_check
        _
      $region10: #{tpu_custom_call.1} parent=5 // pred_check_branch
        %140 = sbr.rel (%p137) target = $region12
      $region11: #{tpu_custom_call.1} parent=5 // pred_region
        %s141 = ssub.s32 %s17, 1
        // Predicated region
        $region13: #{tpu_custom_call.1} parent=11 // pred_check
          %p142 = pneg %p50
        $region14: #{tpu_custom_call.1} parent=11 // pred_check_branch
          %144 = sbr.rel (%p142) target = $region16
        $region15: #{tpu_custom_call.1} parent=11 // pred_region
          %s146 = ssub.s32 16, 16
          %147 = vsyncadd [#allocation5], %s146
          %150 = dma.hbm_to_smem %s0, 16, [#allocation2], [#allocation5]
        $region16: #{tpu_custom_call.1} parent=11 // pred_fallthru
          _
        // Predicated region
        $region17: #{tpu_custom_call.1} parent=11 // pred_check
          %p151 = pneg %p71
        $region18: #{tpu_custom_call.1} parent=11 // pred_check_branch
          %153 = sbr.rel (%p151) target = $region20
        $region19: #{tpu_custom_call.1} parent=11 // pred_region
          %s155 = ssub.s32 16, 16
          %156 = vsyncadd [#allocation6], %s155
          %s158 = sshll.u32 %s1, 4
          %s159 = int_to_ptr.vmem [resolvable:$true] %s158
          %161 = dma.vmem_to_smem %s159, 16, [#allocation7], [#allocation6]
        $region20: #{tpu_custom_call.1} parent=11 // pred_fallthru
          _
      $region12: #{tpu_custom_call.1} parent=5 // pred_fallthru
        _
      %p162 = scmp.lt.s32.totalorder %s17, 2
      // Predicated region
      $region21: #{tpu_custom_call.1} parent=5 // pred_check
        %p163 = pneg %p162
      $region22: #{tpu_custom_call.1} parent=5 // pred_check_branch
        %165 = sbr.rel (%p163) target = $region24
      $region23: #{tpu_custom_call.1} parent=5 // pred_region
        // Predicated region
        $region25: #{tpu_custom_call.1} parent=23 // pred_check
          %p166 = pneg %p93
        $region26: #{tpu_custom_call.1} parent=23 // pred_check_branch
          %168 = sbr.rel (%p166) target = $region28
        $region27: #{tpu_custom_call.1} parent=23 // pred_region
          %s169 = sand.u32 %s83, 1
          %s170 = scalar_lea.sflag [#allocation3], %s169
          %s171 = sand.u32 %s83, 1
          %s172 = smul.addr %s171, 8
          %s173 = scalar_lea.vmem [#allocation8], %s172
          %s174 = smul.u32 2, %s25
          %s176 = ssub.s32 128, 128
          %177 = vsyncadd %s170, %s176
          %s178 = smul.addr %s24, 2
          %s179 = sadd.s32 %s174, %s178
          %s180 = smul.addr %s179, 64
          %s181 = scalar_lea.hbm %s2, %s180
          %s183 = sshll.u32 %s173, 4
          %s184 = int_to_ptr.vmem [resolvable:$true] %s183
          %186 = dma.hbm_to_vmem [thread:$0]  %s181, 128, %s184, %s170
        $region28: #{tpu_custom_call.1} parent=23 // pred_fallthru
          _
      $region24: #{tpu_custom_call.1} parent=5 // pred_fallthru
        _
      %p187 = scmp.le.s32.totalorder 1, %s17
      %p188 = scmp.lt.s32.totalorder %s17, 3
      %p189 = pnand %p187, %p188
      %p190 = pneg %p189
      // Predicated region
      $region29: #{tpu_custom_call.1} parent=5 // pred_check
        _
      $region30: #{tpu_custom_call.1} parent=5 // pred_check_branch
        %192 = sbr.rel (%p189) target = $region32
      $region31: #{tpu_custom_call.1} parent=5 // pred_region
        %s193 = ssub.s32 %s17, 1
        // Predicated region
        $region33: #{tpu_custom_call.1} parent=31 // pred_check
          %p194 = pneg %p50
        $region34: #{tpu_custom_call.1} parent=31 // pred_check_branch
          %196 = sbr.rel (%p194) target = $region36
        $region35: #{tpu_custom_call.1} parent=31 // pred_region
          %197 = dma.done [#allocation5], 16
        $region36: #{tpu_custom_call.1} parent=31 // pred_fallthru
          _
        // Predicated region
        $region37: #{tpu_custom_call.1} parent=31 // pred_check
          %p198 = pneg %p71
        $region38: #{tpu_custom_call.1} parent=31 // pred_check_branch
          %200 = sbr.rel (%p198) target = $region40
        $region39: #{tpu_custom_call.1} parent=31 // pred_region
          %201 = dma.done [#allocation6], 16
        $region40: #{tpu_custom_call.1} parent=31 // pred_fallthru
          _
        %s202 = sand.u32 %s86, 1
        %s203 = scalar_lea.sflag [#allocation3], %s202
        %s204 = sand.u32 %s86, 1
        %s205 = smul.addr %s204, 8
        %s206 = scalar_lea.vmem [#allocation8], %s205
        // Predicated region
        $region41: #{tpu_custom_call.1} parent=31 // pred_check
          %p207 = pneg %p99
        $region42: #{tpu_custom_call.1} parent=31 // pred_check_branch
          %209 = sbr.rel (%p207) target = $region44
        $region43: #{tpu_custom_call.1} parent=31 // pred_region
          %210 = dma.done %s203, 128
        $region44: #{tpu_custom_call.1} parent=31 // pred_fallthru
          _
        %211 = sfence
        %p212 = pneg %p50
        %p213 = pneg %p47
        %p214 = pneg %p71
        %p215 = pneg %p68
        %s216 = sand.u32 %s86, 1
        %s217 = scalar_lea.sflag [#allocation3], %s216
        %s218 = sand.u32 %s86, 1
        %s219 = smul.addr %s218, 8
        %s220 = scalar_lea.vmem [#allocation8], %s219
        %p221 = pneg %p99
        %p222 = pneg %p96
        %p223 = pneg %p127
        %p224 = pneg %p124
        %s225 = sand.u32 %s114, 1
        %s226 = scalar_lea.sflag [#allocation4], %s225
        %s227 = sand.u32 %s114, 1
        %s228 = smul.addr %s227, 8
        %s229 = scalar_lea.vmem [#allocation9], %s228
        %s230 = smul.u32 2, %s27
        %s231 = smul.u32 2, %s27
        %v232 = vlaneseq
        %v233 = vand.u32 %v232, 127
        %v234 = vadd.s32 %v233, 128
        %v235 = vand.u32 %v233, 15
        %v236 = vand.u32 %v234, 15
        %s237 = smul.u32 %s26, 2
        %s238 = sld [smem:[#allocation2 + %s237]]
        %s239 = sld [smem:[#allocation7 + %s237]]
        %v240 = vstv %s238
        %vm241 = vcmp.lt.s32.totalorder %v235, %v240
        %vm242 = vcmp.lt.s32.totalorder %v236, %v240
        %s243 = sadd.s32 %s238, %s239
        %v244 = vstv %s243
        %vm245 = vcmp.ge.s32.totalorder %v235, %v244
        %vm246 = vcmp.ge.s32.totalorder %v236, %v244
        %vm247 = vmor %vm241, %vm245
        %vm248 = vmor %vm242, %vm246
        %s249 = sadd.s32 %s237, 1
        %s250 = sld [smem:[#allocation2 + %s249]]
        %s251 = sld [smem:[#allocation7 + %s249]]
        %v252 = vstv %s250
        %vm253 = vcmp.lt.s32.totalorder %v235, %v252
        %vm254 = vcmp.lt.s32.totalorder %v236, %v252
        %s255 = sadd.s32 %s250, %s251
        %v256 = vstv %s255
        %vm257 = vcmp.ge.s32.totalorder %v235, %v256
        %vm258 = vcmp.ge.s32.totalorder %v236, %v256
        %vm259 = vmor %vm253, %vm257
        %vm260 = vmor %vm254, %vm258
        %vm261 = vmand %vm247, %vm259
        %vm262 = vmand %vm248, %vm260
        %v263 = vld [vmem:[%s206] sm:$0xff]
        %v264 = vsel %vm261, 1, 0
        %v265 = vsel %vm262, 1, 0
        %v266 = vcvt.s32.f32 %v264
        %v267 = vcvt.s32.f32 %v265
        %v270 = vcombine.low %v266, %v267
        %v272 = vmul.f32 %v263, %v270
        %273 = vst [vmem:[%s229] sm:$0xff] %v272
        %s274 = sand.u32 %s114, 1
        %s275 = scalar_lea.sflag [#allocation4], %s274
        %s276 = sand.u32 %s114, 1
        %s277 = smul.addr %s276, 8
        %s278 = scalar_lea.vmem [#allocation9], %s277
        // Predicated region
        $region45: #{tpu_custom_call.1} parent=31 // pred_check
          %p279 = pneg %p124
        $region46: #{tpu_custom_call.1} parent=31 // pred_check_branch
          %281 = sbr.rel (%p279) target = $region48
        $region47: #{tpu_custom_call.1} parent=31 // pred_region
          %s282 = smul.u32 2, %s27
          %s284 = ssub.s32 128, 128
          %285 = vsyncadd %s275, %s284
          %s286 = smul.addr %s26, 2
          %s287 = sadd.s32 %s282, %s286
          %s288 = smul.addr %s287, 64
          %s289 = scalar_lea.hbm %s3, %s288
          %s291 = sshll.u32 %s278, 4
          %s292 = int_to_ptr.vmem [resolvable:$true] %s291
          %294 = dma.vmem_to_hbm [thread:$0]  %s292, 128, %s289, %s275
        $region48: #{tpu_custom_call.1} parent=31 // pred_fallthru
          _
      $region32: #{tpu_custom_call.1} parent=5 // pred_fallthru
        _
      %p295 = scmp.le.s32.totalorder 2, %s17
      // Predicated region
      $region49: #{tpu_custom_call.1} parent=5 // pred_check
        %p296 = pneg %p295
      $region50: #{tpu_custom_call.1} parent=5 // pred_check_branch
        %298 = sbr.rel (%p296) target = $region52
      $region51: #{tpu_custom_call.1} parent=5 // pred_region
        %s299 = ssub.s32 %s17, 2
        // Predicated region
        $region53: #{tpu_custom_call.1} parent=51 // pred_check
          %p300 = pneg %p130
        $region54: #{tpu_custom_call.1} parent=51 // pred_check_branch
          %302 = sbr.rel (%p300) target = $region56
        $region55: #{tpu_custom_call.1} parent=51 // pred_region
          %s303 = sand.u32 %s115, 1
          %s304 = scalar_lea.sflag [#allocation4], %s303
          %s305 = sand.u32 %s115, 1
          %s306 = smul.addr %s305, 8
          %s307 = scalar_lea.vmem [#allocation9], %s306
          %308 = dma.done %s304, 128
        $region56: #{tpu_custom_call.1} parent=51 // pred_fallthru
          _
      $region52: #{tpu_custom_call.1} parent=5 // pred_fallthru
        _
    $region6: #{tpu_custom_call.1} parent=1 // loop_footer
      %s21 = sadd.s32 1, %s17
    $region7: #{tpu_custom_call.1} parent=1 // loop_footer_branch
      %16 = sbr.rel target = $region3
    $region8: #{tpu_custom_call.1} parent=1 // loop_exit
      _
    %309 = vsyncpa [#allocation3], 1
    %s310 = scalar_lea.sflag [#allocation3], 1
    %311 = vsyncpa %s310, 1
    %312 = vsyncpa [#allocation4], 1
    %s313 = scalar_lea.sflag [#allocation4], 1
    %314 = vsyncpa %s313, 1
    %315 = vsyncpa [#allocation5], 1
    %s316 = scalar_lea.sflag [#allocation5], 1
    %317 = vsyncpa %s316, 1
    %318 = vsyncpa [#allocation6], 1
    %s319 = scalar_lea.sflag [#allocation6], 1
    %320 = vsyncpa %s319, 1

</llo_original>
